<compile_context>
chip_gen: v7x
topology: tpu7x:2x2x1
jax: 0.10.0
libtpu: 0.0.40
codegen_flags: <defaults>
</compile_context>

<pallas_src>
import functools

import jax
import jax.numpy as jnp
from jax.experimental import pallas as pl
from jax.experimental.pallas import tpu as pltpu


def _round_up(x, m):
    return ((x + m - 1) // m) * m


def _default_bf16_elementwise():
    """bf16 VPU elementwise only on v6e/v7x-class chips; f32 elsewhere."""
    try:
        kind = jax.devices()[0].device_kind.lower()
    except Exception:
        return False
    return not any(t in kind for t in ("v2", "v3", "v4", "v5"))


def actor_kernel(s_ref, w1_ref, b1_ref, w2_ref, b2_ref, w3_ref, b3_ref,
                 wo_ref, bo_ref, out_ref, *, bf16_elementwise):
    f32 = jnp.float32
    bf16 = jnp.bfloat16

    def dense(x_bf16, w_ref, b_ref):
        # bf16 MXU operands, f32 accumulate, f32 bias add.
        return jnp.dot(x_bf16, w_ref[...], preferred_element_type=f32) + b_ref[...]

    x = s_ref[...].astype(bf16)

    # fc[0]: Linear(S, H) + ReLU6
    h = dense(x, w1_ref, b1_ref)
    h = jnp.clip(h.astype(bf16), 0.0, 6.0) if bf16_elementwise \
        else jnp.clip(h, 0.0, 6.0).astype(bf16)

    # fc[2]: Linear(H, H) + ReLU6
    h = dense(h, w2_ref, b2_ref)
    h = jnp.clip(h.astype(bf16), 0.0, 6.0) if bf16_elementwise \
        else jnp.clip(h, 0.0, 6.0).astype(bf16)

    # fc[4]: Linear(H, H), then F.relu
    h = dense(h, w3_ref, b3_ref)
    h = jnp.maximum(h.astype(bf16), 0.0) if bf16_elementwise \
        else jnp.maximum(h, 0.0).astype(bf16)

    # `x = x / 0.1` is folded into wo (wrapper pre-scales wo by 10).
    # Padded action columns: wo cols are zero and bo is -1e30, so their logits
    # are -1e30 and exp() underflows to exactly 0 (no in-kernel masking).
    logits = dense(h, wo_ref, bo_ref)

    m = jnp.max(logits, axis=-1, keepdims=True)
    e = jnp.exp(logits - m)
    denom = jnp.sum(e, axis=-1, keepdims=True)
    p = e / denom  # exact normalization (rows sum to 1 to f32 precision)

    # torch.clamp(output, min=1e-10, max=1 - 1e-10)
    out_ref[...] = jnp.clip(p, 1e-10, 1.0 - 1e-10).astype(out_ref.dtype)


def actor_net_forward(s, params, *, max_tile_b=512):
    """ActorNet forward via one fused Pallas kernel, tiled over (padded) batch."""
    w1, b1, w2, b2, w3, b3, wo, bo = params
    B, S = s.shape
    H = w1.shape[1]
    A = wo.shape[1]

    # --- fold the /0.1 scale into the output weight (before the bf16 cast) ---
    wo = wo.astype(jnp.float32) * 10.0
    bo = bo.astype(jnp.float32)

    # --- lane-dense output: pad action dim to a multiple of 128 --------------
    # Padded wo columns are zero; padded bo entries are -1e30 so the padded
    # logits are -1e30 (masked for free, exp underflows to 0).
    A_pad = _round_up(max(A, 1), 128)
    if A_pad != A:
        wo = jnp.pad(wo, ((0, 0), (0, A_pad - A)))
        bo = jnp.pad(bo, ((0, 0), (0, A_pad - A)), constant_values=-1e30)

    # --- bf16 MXU operands (biases stay f32) ----------------------------------
    w1 = w1.astype(jnp.bfloat16)
    w2 = w2.astype(jnp.bfloat16)
    w3 = w3.astype(jnp.bfloat16)
    wo = wo.astype(jnp.bfloat16)
    b1 = b1.astype(jnp.float32)
    b2 = b2.astype(jnp.float32)
    b3 = b3.astype(jnp.float32)

    # --- batch tiling: big tiles, but >= 2 grid steps when possible so v7x's
    # two TensorCores both get work; pad ragged batches (rows sliced off). ----
    B_pad8 = _round_up(B, 8)
    if B_pad8 >= 16:
        tile_b = min(max_tile_b, _round_up(pl.cdiv(B_pad8, 2), 8))
    else:
        tile_b = B_pad8
    B_pad = _round_up(B_pad8, tile_b)
    if B_pad != B:
        s = jnp.pad(s, ((0, B_pad - B), (0, 0)))

    grid = (B_pad // tile_b,)

    def rep2(i):  # replicated (weights/biases): constant block index -> resident
        return (0, 0)

    in_specs = [
        pl.BlockSpec((tile_b, S), lambda i: (i, 0)),   # s
        pl.BlockSpec((S, H), rep2),                    # W1
        pl.BlockSpec((1, H), rep2),                    # b1
        pl.BlockSpec((H, H), rep2),                    # W2
        pl.BlockSpec((1, H), rep2),                    # b2
        pl.BlockSpec((H, H), rep2),                    # W3
        pl.BlockSpec((1, H), rep2),                    # b3
        pl.BlockSpec((H, A_pad), rep2),                # Wout (x10-folded, padded)
        pl.BlockSpec((1, A_pad), rep2),                # bout (padded with -1e30)
    ]
    out_specs = pl.BlockSpec((tile_b, A_pad), lambda i: (i, 0))

    # --- explicit VMEM budget (double-buffered I/O tiles + weights + temps) ---
    weight_bytes = (S * H + 2 * H * H + H * A_pad) * 2 + (3 * H + A_pad) * 4
    io_bytes = 2 * tile_b * S * 4 + 2 * tile_b * A_pad * 4
    scratch_bytes = 4 * tile_b * max(H, A_pad) * 4
    est = 2 * weight_bytes + io_bytes + scratch_bytes
    vmem_limit = int(min(max(32 << 20, 2 * est), 64 << 20))

    flops = 2 * B_pad * (S * H + 2 * H * H + H * A_pad)
    bytes_accessed = (
        B_pad * S * 4                               # input (f32)
        + (S * H + 2 * H * H + H * A_pad) * 2       # bf16 weights
        + (3 * H + A_pad) * 4                       # f32 biases
        + B_pad * A_pad * 4                         # output (f32)
    )
    cost = pl.CostEstimate(flops=flops,
                           transcendentals=B_pad * A_pad,
                           bytes_accessed=bytes_accessed)

    out_padded = pl.pallas_call(
        functools.partial(actor_kernel,
                          bf16_elementwise=_default_bf16_elementwise()),
        out_shape=jax.ShapeDtypeStruct((B_pad, A_pad), jnp.float32),
        grid=grid,
        in_specs=in_specs,
        out_specs=out_specs,
        compiler_params=pltpu.CompilerParams(
            dimension_semantics=("parallel",),
            vmem_limit_bytes=vmem_limit,
        ),
        cost_estimate=cost,
    )(s, w1, b1, w2, b2, w3, b3, wo, bo)

    return out_padded[:B, :A]


# ------------------------------ init & references ----------------------------

def xavier_uniform(key, fan_in, fan_out, dtype=jnp.float32):
    # torch.nn.init.xavier_uniform_ (gain=1): U(-a, a), a = sqrt(6/(fan_in+fan_out))
    a = jnp.sqrt(6.0 / (fan_in + fan_out))
    return jax.random.uniform(key, (fan_in, fan_out), dtype, minval=-a, maxval=a)


def init_actor_params(key, state_dim, action_dim, h_dim):
    k1, k2, k3, k4 = jax.random.split(key, 4)
    w1 = xavier_uniform(k1, state_dim, h_dim)
    w2 = xavier_uniform(k2, h_dim, h_dim)
    w3 = xavier_uniform(k3, h_dim, h_dim)
    wo = xavier_uniform(k4, h_dim, action_dim)
    b1 = jnp.full((1, h_dim), 0.01, jnp.float32)
    b2 = jnp.full((1, h_dim), 0.01, jnp.float32)
    b3 = jnp.full((1, h_dim), 0.01, jnp.float32)
    bo = jnp.full((1, action_dim), 0.01, jnp.float32)
    return (w1, b1, w2, b2, w3, b3, wo, bo)


def actor_net_ref_f32(s, params):
    """Pure-JAX f32 reference matching the PyTorch forward exactly."""
    w1, b1, w2, b2, w3, b3, wo, bo = params
    h = jnp.clip(s @ w1 + b1, 0.0, 6.0)
    h = jnp.clip(h @ w2 + b2, 0.0, 6.0)
    h = jnp.maximum(h @ w3 + b3, 0.0)
    h = h / 0.1
    logits = h @ wo + bo
    p = jax.nn.softmax(logits, axis=1)
    return jnp.clip(p, 1e-10, 1.0 - 1e-10)


def actor_net_ref_bf16(s, params):
    """Reference mirroring the kernel's bf16-operand / f32-accumulate dots,
    with the x10 scale folded into wo exactly as the kernel does."""
    w1, b1, w2, b2, w3, b3, wo, bo = params
    bf = jnp.bfloat16

    def mm(x, w):
        return jnp.dot(x.astype(bf), w.astype(bf),
                       preferred_element_type=jnp.float32)

    h = jnp.clip(mm(s, w1) + b1, 0.0, 6.0)
    h = jnp.clip(mm(h, w2) + b2, 0.0, 6.0)
    h = jnp.maximum(mm(h, w3) + b3, 0.0)
    logits = mm(h, wo * 10.0) + bo
    p = jax.nn.softmax(logits, axis=1)
    return jnp.clip(p, 1e-10, 1.0 - 1e-10)


if __name__ == "__main__":
    state_dim, action_dim, h_dim = 16, 8, 32
    batch = 12  # not a multiple of 8: exercises batch padding + 2-step grid

    key = jax.random.PRNGKey(0)
    k_params, k_s = jax.random.split(key)
    params = init_actor_params(k_params, state_dim, action_dim, h_dim)
    s = jax.random.normal(k_s, (batch, state_dim), jnp.float32)

    out = jax.block_until_ready(actor_net_forward(s, params))
    ref = actor_net_ref_bf16(s, params)

    assert out.shape == (batch, action_dim)
    assert bool(jnp.all(jnp.isfinite(out)))
    # Tight match vs. the bf16-dot reference (exact softmax normalization).
    assert jnp.allclose(out, ref, atol=2e-3, rtol=2e-3), "mismatch vs reference"
    # Probabilities sum to ~1 per row.
    assert jnp.allclose(jnp.sum(out, axis=1), 1.0, atol=1e-3)

    print("KERNEL_OK")
</pallas_src>

<mosaic_0001>
module attributes {stable_mosaic.version = 11 : i64} {
  func.func @actor_kernel(%arg0: i32, %arg1: memref<8x16xf32, #tpu.memory_space<vmem>>, %arg2: memref<16x32xbf16, #tpu.memory_space<vmem>>, %arg3: memref<1x32xf32, #tpu.memory_space<vmem>>, %arg4: memref<32x32xbf16, #tpu.memory_space<vmem>>, %arg5: memref<1x32xf32, #tpu.memory_space<vmem>>, %arg6: memref<32x32xbf16, #tpu.memory_space<vmem>>, %arg7: memref<1x32xf32, #tpu.memory_space<vmem>>, %arg8: memref<32x128xbf16, #tpu.memory_space<vmem>>, %arg9: memref<1x128xf32, #tpu.memory_space<vmem>>, %arg10: memref<8x128xf32, #tpu.memory_space<vmem>>) attributes {dimension_semantics = [#tpu.dimension_semantics<parallel>], iteration_bounds = array<i64: 2>, scalar_prefetch = 0 : i64, scratch_operands = 0 : i64, tpu.core_type = #tpu.core_type<tc>, window_params = [{transform_indices = @transform_0, window_bounds = array<i64: 8, 16>}, {pipeline_mode = #tpu.pipeline_mode<synchronous>, transform_indices = @transform_1, window_bounds = array<i64: 16, 32>}, {pipeline_mode = #tpu.pipeline_mode<synchronous>, transform_indices = @transform_2, window_bounds = array<i64: 1, 32>}, {pipeline_mode = #tpu.pipeline_mode<synchronous>, transform_indices = @transform_3, window_bounds = array<i64: 32, 32>}, {pipeline_mode = #tpu.pipeline_mode<synchronous>, transform_indices = @transform_4, window_bounds = array<i64: 1, 32>}, {pipeline_mode = #tpu.pipeline_mode<synchronous>, transform_indices = @transform_5, window_bounds = array<i64: 32, 32>}, {pipeline_mode = #tpu.pipeline_mode<synchronous>, transform_indices = @transform_6, window_bounds = array<i64: 1, 32>}, {pipeline_mode = #tpu.pipeline_mode<synchronous>, transform_indices = @transform_7, window_bounds = array<i64: 32, 128>}, {pipeline_mode = #tpu.pipeline_mode<synchronous>, transform_indices = @transform_8, window_bounds = array<i64: 1, 128>}, {transform_indices = @transform_9, window_bounds = array<i64: 8, 128>}]} {
    %c0 = arith.constant 0 : index
    %c0_0 = arith.constant 0 : index
    %0 = vector.load %arg1[%c0, %c0_0] : memref<8x16xf32, #tpu.memory_space<vmem>>, vector<8x16xf32>
    %1 = arith.truncf %0 : vector<8x16xf32> to vector<8x16xbf16>
    %c0_1 = arith.constant 0 : index
    %c0_2 = arith.constant 0 : index
    %2 = vector.load %arg2[%c0_1, %c0_2] : memref<16x32xbf16, #tpu.memory_space<vmem>>, vector<16x32xbf16>
    %cst = arith.constant dense<0.000000e+00> : vector<8x32xf32>
    %3 = tpu.matmul %1, %2, %cst {dimension_numbers = #tpu.dot_dimension_numbers<[1], [0], [0], [1], [0, 0, 1, 1], [], []>} : vector<8x16xbf16>, vector<16x32xbf16>, vector<8x32xf32> -> vector<8x32xf32>
    %c0_3 = arith.constant 0 : index
    %c0_4 = arith.constant 0 : index
    %4 = vector.load %arg3[%c0_3, %c0_4] : memref<1x32xf32, #tpu.memory_space<vmem>>, vector<1x32xf32>
    %5 = vector.broadcast %4 : vector<1x32xf32> to vector<8x32xf32>
    %6 = arith.addf %3, %5 : vector<8x32xf32>
    %7 = arith.truncf %6 : vector<8x32xf32> to vector<8x32xbf16>
    %cst_5 = arith.constant 0.000000e+00 : f32
    %cst_6 = arith.constant 6.000000e+00 : f32
    %8 = arith.truncf %cst_5 : f32 to bf16
    %9 = vector.broadcast %8 : bf16 to vector<8x32xbf16>
    %10 = arith.maximumf %9, %7 : vector<8x32xbf16>
    %11 = arith.truncf %cst_6 : f32 to bf16
    %12 = vector.broadcast %11 : bf16 to vector<8x32xbf16>
    %13 = arith.minimumf %12, %10 : vector<8x32xbf16>
    %c0_7 = arith.constant 0 : index
    %c0_8 = arith.constant 0 : index
    %14 = vector.load %arg4[%c0_7, %c0_8] : memref<32x32xbf16, #tpu.memory_space<vmem>>, vector<32x32xbf16>
    %cst_9 = arith.constant dense<0.000000e+00> : vector<8x32xf32>
    %15 = tpu.matmul %13, %14, %cst_9 {dimension_numbers = #tpu.dot_dimension_numbers<[1], [0], [0], [1], [0, 0, 1, 1], [], []>} : vector<8x32xbf16>, vector<32x32xbf16>, vector<8x32xf32> -> vector<8x32xf32>
    %c0_10 = arith.constant 0 : index
    %c0_11 = arith.constant 0 : index
    %16 = vector.load %arg5[%c0_10, %c0_11] : memref<1x32xf32, #tpu.memory_space<vmem>>, vector<1x32xf32>
    %17 = vector.broadcast %16 : vector<1x32xf32> to vector<8x32xf32>
    %18 = arith.addf %15, %17 : vector<8x32xf32>
    %19 = arith.truncf %18 : vector<8x32xf32> to vector<8x32xbf16>
    %cst_12 = arith.constant 0.000000e+00 : f32
    %cst_13 = arith.constant 6.000000e+00 : f32
    %20 = arith.truncf %cst_12 : f32 to bf16
    %21 = vector.broadcast %20 : bf16 to vector<8x32xbf16>
    %22 = arith.maximumf %21, %19 : vector<8x32xbf16>
    %23 = arith.truncf %cst_13 : f32 to bf16
    %24 = vector.broadcast %23 : bf16 to vector<8x32xbf16>
    %25 = arith.minimumf %24, %22 : vector<8x32xbf16>
    %c0_14 = arith.constant 0 : index
    %c0_15 = arith.constant 0 : index
    %26 = vector.load %arg6[%c0_14, %c0_15] : memref<32x32xbf16, #tpu.memory_space<vmem>>, vector<32x32xbf16>
    %cst_16 = arith.constant dense<0.000000e+00> : vector<8x32xf32>
    %27 = tpu.matmul %25, %26, %cst_16 {dimension_numbers = #tpu.dot_dimension_numbers<[1], [0], [0], [1], [0, 0, 1, 1], [], []>} : vector<8x32xbf16>, vector<32x32xbf16>, vector<8x32xf32> -> vector<8x32xf32>
    %c0_17 = arith.constant 0 : index
    %c0_18 = arith.constant 0 : index
    %28 = vector.load %arg7[%c0_17, %c0_18] : memref<1x32xf32, #tpu.memory_space<vmem>>, vector<1x32xf32>
    %29 = vector.broadcast %28 : vector<1x32xf32> to vector<8x32xf32>
    %30 = arith.addf %27, %29 : vector<8x32xf32>
    %31 = arith.truncf %30 : vector<8x32xf32> to vector<8x32xbf16>
    %cst_19 = arith.constant 0.000000e+00 : bf16
    %32 = vector.broadcast %cst_19 : bf16 to vector<8x32xbf16>
    %33 = arith.maximumf %31, %32 : vector<8x32xbf16>
    %c0_20 = arith.constant 0 : index
    %c0_21 = arith.constant 0 : index
    %34 = vector.load %arg8[%c0_20, %c0_21] : memref<32x128xbf16, #tpu.memory_space<vmem>>, vector<32x128xbf16>
    %cst_22 = arith.constant dense<0.000000e+00> : vector<8x128xf32>
    %35 = tpu.matmul %33, %34, %cst_22 {dimension_numbers = #tpu.dot_dimension_numbers<[1], [0], [0], [1], [0, 0, 1, 1], [], []>} : vector<8x32xbf16>, vector<32x128xbf16>, vector<8x128xf32> -> vector<8x128xf32>
    %c0_23 = arith.constant 0 : index
    %c0_24 = arith.constant 0 : index
    %36 = vector.load %arg9[%c0_23, %c0_24] : memref<1x128xf32, #tpu.memory_space<vmem>>, vector<1x128xf32>
    %37 = vector.broadcast %36 : vector<1x128xf32> to vector<8x128xf32>
    %38 = arith.addf %35, %37 : vector<8x128xf32>
    %cst_25 = arith.constant dense<0xFF800000> : vector<8xf32>
    %39 = vector.multi_reduction <maximumf>, %38, %cst_25 [1] : vector<8x128xf32> to vector<8xf32>
    %40 = vector.shape_cast %39 : vector<8xf32> to vector<8x1xf32>
    %41 = vector.broadcast %40 : vector<8x1xf32> to vector<8x128xf32>
    %42 = arith.subf %38, %41 : vector<8x128xf32>
    %43 = math.exp %42 : vector<8x128xf32>
    %cst_26 = arith.constant dense<0.000000e+00> : vector<8xf32>
    %44 = vector.multi_reduction <add>, %43, %cst_26 [1] : vector<8x128xf32> to vector<8xf32>
    %45 = vector.shape_cast %44 : vector<8xf32> to vector<8x1xf32>
    %46 = vector.broadcast %45 : vector<8x1xf32> to vector<8x128xf32>
    %47 = arith.divf %43, %46 : vector<8x128xf32>
    %cst_27 = arith.constant 1.000000e-10 : f32
    %cst_28 = arith.constant 1.000000e+00 : f32
    %48 = vector.broadcast %cst_27 : f32 to vector<8x128xf32>
    %49 = arith.maximumf %48, %47 : vector<8x128xf32>
    %50 = vector.broadcast %cst_28 : f32 to vector<8x128xf32>
    %51 = arith.minimumf %50, %49 : vector<8x128xf32>
    %c0_29 = arith.constant 0 : index
    %c0_30 = arith.constant 0 : index
    %52 = vector.load %arg10[%c0_29, %c0_30] : memref<8x128xf32, #tpu.memory_space<vmem>>, vector<8x128xf32>
    tpu.vector_store %arg10[%c0_29, %c0_30], %51 {strides = array<i32>} : memref<8x128xf32, #tpu.memory_space<vmem>>, vector<8x128xf32>,
    return
  }
  func.func @transform_0(%arg0: i32) -> (i32, i32) {
    %c0_i32 = arith.constant 0 : i32
    %c0_i32_0 = arith.constant 0 : i32
    return %arg0, %c0_i32 : i32, i32
  }
  func.func @transform_1(%arg0: i32) -> (i32, i32) {
    %c0_i32 = arith.constant 0 : i32
    %c0_i32_0 = arith.constant 0 : i32
    %c0_i32_1 = arith.constant 0 : i32
    return %c0_i32, %c0_i32_0 : i32, i32
  }
  func.func @transform_2(%arg0: i32) -> (i32, i32) {
    %c0_i32 = arith.constant 0 : i32
    %c0_i32_0 = arith.constant 0 : i32
    %c0_i32_1 = arith.constant 0 : i32
    return %c0_i32, %c0_i32_0 : i32, i32
  }
  func.func @transform_3(%arg0: i32) -> (i32, i32) {
    %c0_i32 = arith.constant 0 : i32
    %c0_i32_0 = arith.constant 0 : i32
    %c0_i32_1 = arith.constant 0 : i32
    return %c0_i32, %c0_i32_0 : i32, i32
  }
  func.func @transform_4(%arg0: i32) -> (i32, i32) {
    %c0_i32 = arith.constant 0 : i32
    %c0_i32_0 = arith.constant 0 : i32
    %c0_i32_1 = arith.constant 0 : i32
    return %c0_i32, %c0_i32_0 : i32, i32
  }
  func.func @transform_5(%arg0: i32) -> (i32, i32) {
    %c0_i32 = arith.constant 0 : i32
    %c0_i32_0 = arith.constant 0 : i32
    %c0_i32_1 = arith.constant 0 : i32
    return %c0_i32, %c0_i32_0 : i32, i32
  }
  func.func @transform_6(%arg0: i32) -> (i32, i32) {
    %c0_i32 = arith.constant 0 : i32
    %c0_i32_0 = arith.constant 0 : i32
    %c0_i32_1 = arith.constant 0 : i32
    return %c0_i32, %c0_i32_0 : i32, i32
  }
  func.func @transform_7(%arg0: i32) -> (i32, i32) {
    %c0_i32 = arith.constant 0 : i32
    %c0_i32_0 = arith.constant 0 : i32
    %c0_i32_1 = arith.constant 0 : i32
    return %c0_i32, %c0_i32_0 : i32, i32
  }
  func.func @transform_8(%arg0: i32) -> (i32, i32) {
    %c0_i32 = arith.constant 0 : i32
    %c0_i32_0 = arith.constant 0 : i32
    %c0_i32_1 = arith.constant 0 : i32
    return %c0_i32, %c0_i32_0 : i32, i32
  }
  func.func @transform_9(%arg0: i32) -> (i32, i32) {
    %c0_i32 = arith.constant 0 : i32
    %c0_i32_0 = arith.constant 0 : i32
    return %arg0, %c0_i32 : i32, i32
  }
}

</mosaic_0001>

<llo_original>
// kernel: tpu_custom_call.1
$region0: #{tpu_custom_call.1}
  #allocation0 [shape = 'u32[]', space=smem, size = 0x4, offset = 0x4, fixed_abs, tag = 'smem constant byte address 0x4 - core index']
  #allocation1 [shape = 'u32[144,128]{1,0:T(1,128)}', space=vmem, size = 0x12000, scoped, tag = 'internal scratch']
  %s0 = inlined_call_operand.hbm [shape: f32[16,16], index: 0, kind: input, shape index: {}]
  %s1 = inlined_call_operand.hbm [shape: bf16[16,32], index: 1, kind: input, shape index: {}]
  %s2 = inlined_call_operand.vmem [shape: f32[1,32], index: 2, kind: input, shape index: {}]
  %s3 = inlined_call_operand.hbm [shape: bf16[32,32], index: 3, kind: input, shape index: {}]
  %s4 = inlined_call_operand.vmem [shape: f32[1,32], index: 4, kind: input, shape index: {}]
  %s5 = inlined_call_operand.vmem [shape: bf16[32,32], index: 5, kind: input, shape index: {}]
  %s6 = inlined_call_operand.vmem [shape: f32[1,32], index: 6, kind: input, shape index: {}]
  %s7 = inlined_call_operand.hbm [shape: bf16[32,128], index: 7, kind: input, shape index: {}]
  %s8 = inlined_call_operand.vmem [shape: f32[1,128], index: 8, kind: input, shape index: {}]
  %s9 = inlined_call_operand.hbm [shape: f32[16,128], index: 9, kind: output, shape index: {}]
  %s10 = sld [smem:[#allocation0]]
  $region85: #{tpu_custom_call.1} parent=0
    _
  %s12 = ssub.s32 1, %s10
  %s13 = scalar_select 0, %s12, %s10
  $region1: #{tpu_custom_call.1} parent=0
    #allocation2 [shape = 'u8[8192]{0}', space=vmem, size = 0x2000, scoped, tag = 'input window, operand 0']
    #allocation3 [shape = 's32[2]{0}', space=sflag, size = 0x8, scoped, tag = 'scoped memory for tpu_custom_call.1']
    #allocation4 [shape = 's32[2]{0}', space=sflag, size = 0x8, scoped, tag = 'scoped memory for tpu_custom_call.1']
    #allocation5 [shape = 'u8[4096]{0}', space=vmem, size = 0x1000, scoped, tag = 'input window, operand 1, single buffered']
    #allocation6 [shape = 's32[1]{0}', space=sflag, size = 0x4, scoped, tag = 'scoped memory for tpu_custom_call.1']
    #allocation7 [shape = 'u8[8192]{0}', space=vmem, size = 0x2000, scoped, tag = 'input window, operand 3, single buffered']
    #allocation8 [shape = 'u8[8192]{0}', space=vmem, size = 0x2000, scoped, tag = 'input window, operand 7, single buffered']
    #allocation9 [shape = 's32[1]{0}', space=sflag, size = 0x4, scoped, tag = 'scoped memory for tpu_custom_call.1']
    #allocation10 [shape = 'u8[8192]{0}', space=vmem, size = 0x2000, scoped, tag = 'output window, operand 0']
    %14 = vsyncpa [#allocation3], 0
    %s15 = scalar_lea.sflag [#allocation3], 1
    %16 = vsyncpa %s15, 0
    %17 = vsyncpa [#allocation6], 0
    %18 = vsyncpa [#allocation9], 0
    %19 = vsyncpa [#allocation4], 0
    %s20 = scalar_lea.sflag [#allocation4], 1
    %21 = vsyncpa %s20, 0
    loop: start=0, step=1, limit=4
    $region2: #{tpu_custom_call.1} parent=1 // loop_pre_header
      _
    $region3: #{tpu_custom_call.1} parent=1 // loop_header
      %s23 = sphi 0, %s27
      %p24 = scmp.ge.s32.totalorder %s23, 4
      %s33 = sphi 0, %s35
      %s36 = sphi 0, %s33
      %s37 = sphi 0, %s36
      %s53 = sphi 0, %s37
      %s57 = sphi 0, %s57
      %s59 = sphi 0, %s57
      %s60 = sphi 0, %s59
      %s74 = sphi 0, %s60
      %s78 = sphi 0, %s78
      %s80 = sphi 0, %s78
      %s81 = sphi 0, %s80
      %s95 = sphi 0, %s81
      %s99 = sphi 0, %s99
      %s101 = sphi 0, %s99
      %s102 = sphi 0, %s101
      %s116 = sphi 0, %s102
      %s120 = sphi 0, %s120
      %s122 = sphi 0, %s120
      %s123 = sphi 0, %s122
      %s137 = sphi 0, %s123
      %s141 = sphi 0, %s141
      %s143 = sphi 0, %s141
      %s144 = sphi 0, %s143
      %s158 = sphi 0, %s144
      %s162 = sphi 0, %s162
      %s164 = sphi 0, %s162
      %s165 = sphi 0, %s164
      %s179 = sphi 0, %s165
      %s183 = sphi 0, %s183
      %s185 = sphi 0, %s183
      %s186 = sphi 0, %s185
      %s200 = sphi 0, %s186
      %s204 = sphi 0, %s204
      %s206 = sphi 0, %s204
      %s207 = sphi 0, %s206
      %s221 = sphi 0, %s207
      %s227 = sphi 0, %s229
      %s230 = sphi 0, %s227
      %s231 = sphi 0, %s230
      %s247 = sphi 0, %s231
    $region4: #{tpu_custom_call.1} parent=1 // loop_header_branch
      %26 = sbr.rel (%p24) target = $region8
    $region5: #{tpu_custom_call.1} parent=1 // loop_body
      %s28 = ssub.s32 %s23, 1
      %s29 = ssub.s32 %s23, 2
      %s30 = sadd.s32 %s23, 1
      %s31 = ssub.s32 %s23, %s30
      %p32 = scmp.eq.s32.totalorder %s31, 0
      %s34 = sadd.s32 %s33, 1
      %s35 = scalar_select %p32, %s33, %s34
      %p38 = pneg %p32
      %p39 = scmp.eq.s32.totalorder %s23, 1
      %p40 = por %p38, %p39
      %p41 = scmp.ne.s32.totalorder %s33, %s36
      %p42 = scmp.eq.s32.totalorder %s23, 0
      %p43 = por %p41, %p42
      %p44 = scmp.ne.s32.totalorder %s33, %s36
      %p45 = scmp.eq.s32.totalorder %s28, 1
      %p46 = por %p44, %p45
      %p47 = scmp.ne.s32.totalorder %s36, %s37
      %p48 = scmp.eq.s32.totalorder %s28, 0
      %p49 = por %p47, %p48
      %p50 = scmp.ne.s32.totalorder %s36, %s37
      %p51 = scmp.eq.s32.totalorder %s29, 1
      %p52 = por %p50, %p51
      %p54 = scmp.ne.s32.totalorder %s37, %s53
      %p55 = scmp.eq.s32.totalorder %s29, 0
      %p56 = por %p54, %p55
      %s58 = sadd.s32 %s57, 1
      %p61 = scmp.eq.s32.totalorder %s23, 1
      %p62 = scmp.ne.s32.totalorder %s57, %s59
      %p63 = scmp.eq.s32.totalorder %s23, 0
      %p64 = por %p62, %p63
      %p65 = scmp.ne.s32.totalorder %s57, %s59
      %p66 = scmp.eq.s32.totalorder %s28, 1
      %p67 = por %p65, %p66
      %p68 = scmp.ne.s32.totalorder %s59, %s60
      %p69 = scmp.eq.s32.totalorder %s28, 0
      %p70 = por %p68, %p69
      %p71 = scmp.ne.s32.totalorder %s59, %s60
      %p72 = scmp.eq.s32.totalorder %s29, 1
      %p73 = por %p71, %p72
      %p75 = scmp.ne.s32.totalorder %s60, %s74
      %p76 = scmp.eq.s32.totalorder %s29, 0
      %p77 = por %p75, %p76
      %s79 = sadd.s32 %s78, 1
      %p82 = scmp.eq.s32.totalorder %s23, 1
      %p83 = scmp.ne.s32.totalorder %s78, %s80
      %p84 = scmp.eq.s32.totalorder %s23, 0
      %p85 = por %p83, %p84
      %p86 = scmp.ne.s32.totalorder %s78, %s80
      %p87 = scmp.eq.s32.totalorder %s28, 1
      %p88 = por %p86, %p87
      %p89 = scmp.ne.s32.totalorder %s80, %s81
      %p90 = scmp.eq.s32.totalorder %s28, 0
      %p91 = por %p89, %p90
      %p92 = scmp.ne.s32.totalorder %s80, %s81
      %p93 = scmp.eq.s32.totalorder %s29, 1
      %p94 = por %p92, %p93
      %p96 = scmp.ne.s32.totalorder %s81, %s95
      %p97 = scmp.eq.s32.totalorder %s29, 0
      %p98 = por %p96, %p97
      %s100 = sadd.s32 %s99, 1
      %p103 = scmp.eq.s32.totalorder %s23, 1
      %p104 = scmp.ne.s32.totalorder %s99, %s101
      %p105 = scmp.eq.s32.totalorder %s23, 0
      %p106 = por %p104, %p105
      %p107 = scmp.ne.s32.totalorder %s99, %s101
      %p108 = scmp.eq.s32.totalorder %s28, 1
      %p109 = por %p107, %p108
      %p110 = scmp.ne.s32.totalorder %s101, %s102
      %p111 = scmp.eq.s32.totalorder %s28, 0
      %p112 = por %p110, %p111
      %p113 = scmp.ne.s32.totalorder %s101, %s102
      %p114 = scmp.eq.s32.totalorder %s29, 1
      %p115 = por %p113, %p114
      %p117 = scmp.ne.s32.totalorder %s102, %s116
      %p118 = scmp.eq.s32.totalorder %s29, 0
      %p119 = por %p117, %p118
      %s121 = sadd.s32 %s120, 1
      %p124 = scmp.eq.s32.totalorder %s23, 1
      %p125 = scmp.ne.s32.totalorder %s120, %s122
      %p126 = scmp.eq.s32.totalorder %s23, 0
      %p127 = por %p125, %p126
      %p128 = scmp.ne.s32.totalorder %s120, %s122
      %p129 = scmp.eq.s32.totalorder %s28, 1
      %p130 = por %p128, %p129
      %p131 = scmp.ne.s32.totalorder %s122, %s123
      %p132 = scmp.eq.s32.totalorder %s28, 0
      %p133 = por %p131, %p132
      %p134 = scmp.ne.s32.totalorder %s122, %s123
      %p135 = scmp.eq.s32.totalorder %s29, 1
      %p136 = por %p134, %p135
      %p138 = scmp.ne.s32.totalorder %s123, %s137
      %p139 = scmp.eq.s32.totalorder %s29, 0
      %p140 = por %p138, %p139
      %s142 = sadd.s32 %s141, 1
      %p145 = scmp.eq.s32.totalorder %s23, 1
      %p146 = scmp.ne.s32.totalorder %s141, %s143
      %p147 = scmp.eq.s32.totalorder %s23, 0
      %p148 = por %p146, %p147
      %p149 = scmp.ne.s32.totalorder %s141, %s143
      %p150 = scmp.eq.s32.totalorder %s28, 1
      %p151 = por %p149, %p150
      %p152 = scmp.ne.s32.totalorder %s143, %s144
      %p153 = scmp.eq.s32.totalorder %s28, 0
      %p154 = por %p152, %p153
      %p155 = scmp.ne.s32.totalorder %s143, %s144
      %p156 = scmp.eq.s32.totalorder %s29, 1
      %p157 = por %p155, %p156
      %p159 = scmp.ne.s32.totalorder %s144, %s158
      %p160 = scmp.eq.s32.totalorder %s29, 0
      %p161 = por %p159, %p160
      %s163 = sadd.s32 %s162, 1
      %p166 = scmp.eq.s32.totalorder %s23, 1
      %p167 = scmp.ne.s32.totalorder %s162, %s164
      %p168 = scmp.eq.s32.totalorder %s23, 0
      %p169 = por %p167, %p168
      %p170 = scmp.ne.s32.totalorder %s162, %s164
      %p171 = scmp.eq.s32.totalorder %s28, 1
      %p172 = por %p170, %p171
      %p173 = scmp.ne.s32.totalorder %s164, %s165
      %p174 = scmp.eq.s32.totalorder %s28, 0
      %p175 = por %p173, %p174
      %p176 = scmp.ne.s32.totalorder %s164, %s165
      %p177 = scmp.eq.s32.totalorder %s29, 1
      %p178 = por %p176, %p177
      %p180 = scmp.ne.s32.totalorder %s165, %s179
      %p181 = scmp.eq.s32.totalorder %s29, 0
      %p182 = por %p180, %p181
      %s184 = sadd.s32 %s183, 1
      %p187 = scmp.eq.s32.totalorder %s23, 1
      %p188 = scmp.ne.s32.totalorder %s183, %s185
      %p189 = scmp.eq.s32.totalorder %s23, 0
      %p190 = por %p188, %p189
      %p191 = scmp.ne.s32.totalorder %s183, %s185
      %p192 = scmp.eq.s32.totalorder %s28, 1
      %p193 = por %p191, %p192
      %p194 = scmp.ne.s32.totalorder %s185, %s186
      %p195 = scmp.eq.s32.totalorder %s28, 0
      %p196 = por %p194, %p195
      %p197 = scmp.ne.s32.totalorder %s185, %s186
      %p198 = scmp.eq.s32.totalorder %s29, 1
      %p199 = por %p197, %p198
      %p201 = scmp.ne.s32.totalorder %s186, %s200
      %p202 = scmp.eq.s32.totalorder %s29, 0
      %p203 = por %p201, %p202
      %s205 = sadd.s32 %s204, 1
      %p208 = scmp.eq.s32.totalorder %s23, 1
      %p209 = scmp.ne.s32.totalorder %s204, %s206
      %p210 = scmp.eq.s32.totalorder %s23, 0
      %p211 = por %p209, %p210
      %p212 = scmp.ne.s32.totalorder %s204, %s206
      %p213 = scmp.eq.s32.totalorder %s28, 1
      %p214 = por %p212, %p213
      %p215 = scmp.ne.s32.totalorder %s206, %s207
      %p216 = scmp.eq.s32.totalorder %s28, 0
      %p217 = por %p215, %p216
      %p218 = scmp.ne.s32.totalorder %s206, %s207
      %p219 = scmp.eq.s32.totalorder %s29, 1
      %p220 = por %p218, %p219
      %p222 = scmp.ne.s32.totalorder %s207, %s221
      %p223 = scmp.eq.s32.totalorder %s29, 0
      %p224 = por %p222, %p223
      %s225 = ssub.s32 %s23, %s30
      %p226 = scmp.eq.s32.totalorder %s225, 0
      %s228 = sadd.s32 %s227, 1
      %s229 = scalar_select %p226, %s227, %s228
      %p232 = pneg %p226
      %p233 = scmp.eq.s32.totalorder %s23, 1
      %p234 = por %p232, %p233
      %p235 = scmp.ne.s32.totalorder %s227, %s230
      %p236 = scmp.eq.s32.totalorder %s23, 0
      %p237 = por %p235, %p236
      %p238 = scmp.ne.s32.totalorder %s227, %s230
      %p239 = scmp.eq.s32.totalorder %s28, 1
      %p240 = por %p238, %p239
      %p241 = scmp.ne.s32.totalorder %s230, %s231
      %p242 = scmp.eq.s32.totalorder %s28, 0
      %p243 = por %p241, %p242
      %p244 = scmp.ne.s32.totalorder %s230, %s231
      %p245 = scmp.eq.s32.totalorder %s29, 1
      %p246 = por %p244, %p245
      %p248 = scmp.ne.s32.totalorder %s231, %s247
      %p249 = scmp.eq.s32.totalorder %s29, 0
      %p250 = por %p248, %p249
      %p251 = scmp.le.s32.totalorder 1, %s23
      %p252 = scmp.lt.s32.totalorder %s23, 3
      %p253 = pnand %p251, %p252
      %p254 = pneg %p253
      // Predicated region
      $region9: #{tpu_custom_call.1} parent=5 // pred_check
        _
      $region10: #{tpu_custom_call.1} parent=5 // pred_check_branch
        %256 = sbr.rel (%p253) target = $region12
      $region11: #{tpu_custom_call.1} parent=5 // pred_region
        %s257 = ssub.s32 %s23, 1
        // Predicated region
        $region13: #{tpu_custom_call.1} parent=11 // pred_check
          %p258 = pneg %p70
        $region14: #{tpu_custom_call.1} parent=11 // pred_check_branch
          %260 = sbr.rel (%p258) target = $region16
        $region15: #{tpu_custom_call.1} parent=11 // pred_region
          %s262 = ssub.s32 128, 128
          %263 = vsyncadd [#allocation6], %s262
          %s264 = sshll.u32 [#allocation5], 4
          %s265 = int_to_ptr.vmem [resolvable:$true] %s264
          %270 = dma.hbm_to_vmem [thread:$0]  %s1, 128, %s265, [#allocation6], 64, 64, 4
        $region16: #{tpu_custom_call.1} parent=11 // pred_fallthru
          _
        // Predicated region
        $region17: #{tpu_custom_call.1} parent=11 // pred_check
          %p271 = pneg %p91
        $region18: #{tpu_custom_call.1} parent=11 // pred_check_branch
          %273 = sbr.rel (%p271) target = $region20
        $region19: #{tpu_custom_call.1} parent=11 // pred_region
          _
        $region20: #{tpu_custom_call.1} parent=11 // pred_fallthru
          _
        // Predicated region
        $region21: #{tpu_custom_call.1} parent=11 // pred_check
          %p274 = pneg %p112
        $region22: #{tpu_custom_call.1} parent=11 // pred_check_branch
          %276 = sbr.rel (%p274) target = $region24
        $region23: #{tpu_custom_call.1} parent=11 // pred_region
          %s278 = ssub.s32 256, 256
          %279 = vsyncadd [#allocation6], %s278
          %s280 = sshll.u32 [#allocation7], 4
          %s281 = int_to_ptr.vmem [resolvable:$true] %s280
          %286 = dma.hbm_to_vmem [thread:$0]  %s3, 256, %s281, [#allocation6], 64, 64, 4
        $region24: #{tpu_custom_call.1} parent=11 // pred_fallthru
          _
        // Predicated region
        $region25: #{tpu_custom_call.1} parent=11 // pred_check
          %p287 = pneg %p133
        $region26: #{tpu_custom_call.1} parent=11 // pred_check_branch
          %289 = sbr.rel (%p287) target = $region28
        $region27: #{tpu_custom_call.1} parent=11 // pred_region
          _
        $region28: #{tpu_custom_call.1} parent=11 // pred_fallthru
          _
        // Predicated region
        $region29: #{tpu_custom_call.1} parent=11 // pred_check
          %p290 = pneg %p154
        $region30: #{tpu_custom_call.1} parent=11 // pred_check_branch
          %292 = sbr.rel (%p290) target = $region32
        $region31: #{tpu_custom_call.1} parent=11 // pred_region
          _
        $region32: #{tpu_custom_call.1} parent=11 // pred_fallthru
          _
        // Predicated region
        $region33: #{tpu_custom_call.1} parent=11 // pred_check
          %p293 = pneg %p175
        $region34: #{tpu_custom_call.1} parent=11 // pred_check_branch
          %295 = sbr.rel (%p293) target = $region36
        $region35: #{tpu_custom_call.1} parent=11 // pred_region
          _
        $region36: #{tpu_custom_call.1} parent=11 // pred_fallthru
          _
        // Predicated region
        $region37: #{tpu_custom_call.1} parent=11 // pred_check
          %p296 = pneg %p196
        $region38: #{tpu_custom_call.1} parent=11 // pred_check_branch
          %298 = sbr.rel (%p296) target = $region40
        $region39: #{tpu_custom_call.1} parent=11 // pred_region
          %s300 = ssub.s32 256, 256
          %301 = vsyncadd [#allocation9], %s300
          %s302 = sshll.u32 [#allocation8], 4
          %s303 = int_to_ptr.vmem [resolvable:$true] %s302
          %308 = dma.hbm_to_vmem [thread:$0]  %s7, 256, %s303, [#allocation9], 64, 64, 4
        $region40: #{tpu_custom_call.1} parent=11 // pred_fallthru
          _
        // Predicated region
        $region41: #{tpu_custom_call.1} parent=11 // pred_check
          %p309 = pneg %p217
        $region42: #{tpu_custom_call.1} parent=11 // pred_check_branch
          %311 = sbr.rel (%p309) target = $region44
        $region43: #{tpu_custom_call.1} parent=11 // pred_region
          _
        $region44: #{tpu_custom_call.1} parent=11 // pred_fallthru
          _
      $region12: #{tpu_custom_call.1} parent=5 // pred_fallthru
        _
      %p312 = scmp.lt.s32.totalorder %s23, 2
      // Predicated region
      $region45: #{tpu_custom_call.1} parent=5 // pred_check
        %p313 = pneg %p312
      $region46: #{tpu_custom_call.1} parent=5 // pred_check_branch
        %315 = sbr.rel (%p313) target = $region48
      $region47: #{tpu_custom_call.1} parent=5 // pred_region
        // Predicated region
        $region49: #{tpu_custom_call.1} parent=47 // pred_check
          %p316 = pneg %p43
        $region50: #{tpu_custom_call.1} parent=47 // pred_check_branch
          %318 = sbr.rel (%p316) target = $region52
        $region51: #{tpu_custom_call.1} parent=47 // pred_region
          %s319 = sand.u32 %s33, 1
          %s320 = scalar_lea.sflag [#allocation3], %s319
          %s321 = sand.u32 %s33, 1
          %s322 = smul.addr %s321, 8
          %s323 = scalar_lea.vmem [#allocation2], %s322
          %s325 = ssub.s32 128, 128
          %326 = vsyncadd %s320, %s325
          %s327 = smul.addr %s23, 128
          %s328 = scalar_lea.hbm %s0, %s327
          %s330 = sshll.u32 %s323, 4
          %s331 = int_to_ptr.vmem [resolvable:$true] %s330
          %333 = dma.hbm_to_vmem [thread:$0]  %s328, 128, %s331, %s320
        $region52: #{tpu_custom_call.1} parent=47 // pred_fallthru
          _
      $region48: #{tpu_custom_call.1} parent=5 // pred_fallthru
        _
      %p334 = scmp.le.s32.totalorder 1, %s23
      %p335 = scmp.lt.s32.totalorder %s23, 3
      %p336 = pnand %p334, %p335
      %p337 = pneg %p336
      // Predicated region
      $region53: #{tpu_custom_call.1} parent=5 // pred_check
        _
      $region54: #{tpu_custom_call.1} parent=5 // pred_check_branch
        %339 = sbr.rel (%p336) target = $region56
      $region55: #{tpu_custom_call.1} parent=5 // pred_region
        %s340 = ssub.s32 %s23, 1
        %s341 = sand.u32 %s36, 1
        %s342 = scalar_lea.sflag [#allocation3], %s341
        %s343 = sand.u32 %s36, 1
        %s344 = smul.addr %s343, 8
        %s345 = scalar_lea.vmem [#allocation2], %s344
        // Predicated region
        $region57: #{tpu_custom_call.1} parent=55 // pred_check
          %p346 = pneg %p49
        $region58: #{tpu_custom_call.1} parent=55 // pred_check_branch
          %348 = sbr.rel (%p346) target = $region60
        $region59: #{tpu_custom_call.1} parent=55 // pred_region
          %349 = dma.done %s342, 128
        $region60: #{tpu_custom_call.1} parent=55 // pred_fallthru
          _
        // Predicated region
        $region61: #{tpu_custom_call.1} parent=55 // pred_check
          %p350 = pneg %p70
        $region62: #{tpu_custom_call.1} parent=55 // pred_check_branch
          %352 = sbr.rel (%p350) target = $region64
        $region63: #{tpu_custom_call.1} parent=55 // pred_region
          %353 = dma.done [#allocation6], 128
        $region64: #{tpu_custom_call.1} parent=55 // pred_fallthru
          _
        // Predicated region
        $region65: #{tpu_custom_call.1} parent=55 // pred_check
          %p354 = pneg %p112
        $region66: #{tpu_custom_call.1} parent=55 // pred_check_branch
          %356 = sbr.rel (%p354) target = $region68
        $region67: #{tpu_custom_call.1} parent=55 // pred_region
          %357 = dma.done [#allocation6], 256
        $region68: #{tpu_custom_call.1} parent=55 // pred_fallthru
          _
        // Predicated region
        $region69: #{tpu_custom_call.1} parent=55 // pred_check
          %p358 = pneg %p196
        $region70: #{tpu_custom_call.1} parent=55 // pred_check_branch
          %360 = sbr.rel (%p358) target = $region72
        $region71: #{tpu_custom_call.1} parent=55 // pred_region
          %361 = dma.done [#allocation9], 256
        $region72: #{tpu_custom_call.1} parent=55 // pred_fallthru
          _
        %s362 = sand.u32 %s36, 1
        %s363 = scalar_lea.sflag [#allocation3], %s362
        %s364 = sand.u32 %s36, 1
        %s365 = smul.addr %s364, 8
        %s366 = scalar_lea.vmem [#allocation2], %s365
        %p367 = pneg %p49
        %p368 = pneg %p46
        %p369 = pneg %p70
        %p370 = pneg %p67
        %p371 = pneg %p91
        %p372 = pneg %p88
        %p373 = pneg %p112
        %p374 = pneg %p109
        %p375 = pneg %p133
        %p376 = pneg %p130
        %p377 = pneg %p154
        %p378 = pneg %p151
        %p379 = pneg %p175
        %p380 = pneg %p172
        %p381 = pneg %p196
        %p382 = pneg %p193
        %p383 = pneg %p217
        %p384 = pneg %p214
        %p385 = pneg %p243
        %p386 = pneg %p240
        %s387 = sand.u32 %s230, 1
        %s388 = scalar_lea.sflag [#allocation4], %s387
        %s389 = sand.u32 %s230, 1
        %s390 = smul.addr %s389, 8
        %s391 = scalar_lea.vmem [#allocation10], %s390
        %v394 = vld [vmem:[%s345] sm:$0xff]
        %v395 = vpack.c.bf16 %v394, %v394
        %v396 = vld [vmem:[#allocation5] sm:$0xf]
        %v397 = vld [vmem:[#allocation5 + $0x4] sm:$0xf]
        %v398 = vld [vmem:[%s2] sm:$0x1]
        %v400 = vlaneseq
        %v401 = vshrl.u32 %v400, 7
        %v402 = vsub.s32 0, %v401
        %v403 = vrot.slane %v398, %v402
        %v407 = vunpack.c.l.b16 %v396
        %v408 = vunpack.c.l.b16 %v397
        %v409 = vpack.c.b16 %v408, %v407
        %vm411 = vcmask 130048
        %v413 = vsel %vm411, %v395, 0
        %415 = vmatprep.subr.bf16.mxu0 0
        %416 = vmatpush1.bf16.msra.mxu0 %v409
        %417 = vmatprep.subr.bf16.mxu0 0
        %418 = vmatpush1.bf16.msra.mxu0 0
        %419 = vmatprep.subr.bf16.mxu0 0
        %420 = vmatpush1.bf16.msra.mxu0 0
        %421 = vmatprep.subr.bf16.mxu0 0
        %422 = vmatpush1.bf16.msra.mxu0 0
        %423 = vmatprep.subr.bf16.mxu0 0
        %424 = vmatpush1.bf16.msra.mxu0 0
        %425 = vmatprep.subr.bf16.mxu0 0
        %426 = vmatpush1.bf16.msra.mxu0 0
        %427 = vmatprep.subr.bf16.mxu0 0
        %428 = vmatpush1.bf16.msra.mxu0 0
        %429 = vmatprep.subr.bf16.mxu0 0
        %430 = vmatpush1.bf16.msra.mxu0 0
        %431 = vmatprep.subr.bf16.mxu0 0
        %432 = vmatpush1.bf16.msra.mxu0 0
        %433 = vmatprep.subr.bf16.mxu0 0
        %434 = vmatpush1.bf16.msra.mxu0 0
        %435 = vmatprep.subr.bf16.mxu0 0
        %436 = vmatpush1.bf16.msra.mxu0 0
        %437 = vmatprep.subr.bf16.mxu0 0
        %438 = vmatpush1.bf16.msra.mxu0 0
        %439 = vmatprep.subr.bf16.mxu0 0
        %440 = vmatpush1.bf16.msra.mxu0 0
        %441 = vmatprep.subr.bf16.mxu0 0
        %442 = vmatpush1.bf16.msra.mxu0 0
        %443 = vmatprep.subr.bf16.mxu0 0
        %444 = vmatpush1.bf16.msra.mxu0 0
        %445 = vmatprep.subr.bf16.mxu0 0
        %446 = vmatpush1.bf16.msra.mxu0 0
        %447 = vmatprep.mubr.bf16.mxu0 0
        %448 = vmatmul.mubr.bf16.gmra.mrb[0].mxu0 %v413
        %v449 = vpop.f32.mrb[0].mxu0
        %v450 = vadd.f32 %v403, %v449
        %v451 = vpop.f32.mrb[0].mxu0
        %v452 = vpop.f32.mrb[0].mxu0
        %v453 = vpop.f32.mrb[0].mxu0
        %454 = vdwg.mxu0
        %v455 = vpack.c.bf16 %v450, %v450
        %v456 = vmax.bf16 %v455, 0
        %v457 = vmin.bf16 %v456, 1086341312
        %v458 = vld [vmem:[#allocation7] sm:$0xf]
        %v459 = vld [vmem:[#allocation7 + $0x4] sm:$0xf]
        %v460 = vld [vmem:[#allocation7 + $0x8] sm:$0xf]
        %v461 = vld [vmem:[#allocation7 + $0xc] sm:$0xf]
        %v462 = vld [vmem:[%s4] sm:$0x1]
        %v464 = vlaneseq
        %v465 = vshrl.u32 %v464, 7
        %v466 = vsub.s32 0, %v465
        %v467 = vrot.slane %v462, %v466
        %v473 = vunpack.c.l.b16 %v458
        %v474 = vunpack.c.l.b16 %v459
        %v475 = vunpack.c.l.b16 %v460
        %v476 = vunpack.c.l.b16 %v461
        %v477 = vpack.c.b16 %v474, %v473
        %v478 = vpack.c.b16 %v476, %v475
        %vm481 = vcmask 261120
        %v483 = vsel %vm481, %v457, 0
        %485 = vmatprep.subr.bf16.mxu0 0
        %486 = vmatpush1.bf16.msra.mxu0 %v477
        %487 = vmatprep.subr.bf16.mxu0 0
        %488 = vmatpush1.bf16.msra.mxu0 %v478
        %489 = vmatprep.subr.bf16.mxu0 0
        %490 = vmatpush1.bf16.msra.mxu0 0
        %491 = vmatprep.subr.bf16.mxu0 0
        %492 = vmatpush1.bf16.msra.mxu0 0
        %493 = vmatprep.subr.bf16.mxu0 0
        %494 = vmatpush1.bf16.msra.mxu0 0
        %495 = vmatprep.subr.bf16.mxu0 0
        %496 = vmatpush1.bf16.msra.mxu0 0
        %497 = vmatprep.subr.bf16.mxu0 0
        %498 = vmatpush1.bf16.msra.mxu0 0
        %499 = vmatprep.subr.bf16.mxu0 0
        %500 = vmatpush1.bf16.msra.mxu0 0
        %501 = vmatprep.subr.bf16.mxu0 0
        %502 = vmatpush1.bf16.msra.mxu0 0
        %503 = vmatprep.subr.bf16.mxu0 0
        %504 = vmatpush1.bf16.msra.mxu0 0
        %505 = vmatprep.subr.bf16.mxu0 0
        %506 = vmatpush1.bf16.msra.mxu0 0
        %507 = vmatprep.subr.bf16.mxu0 0
        %508 = vmatpush1.bf16.msra.mxu0 0
        %509 = vmatprep.subr.bf16.mxu0 0
        %510 = vmatpush1.bf16.msra.mxu0 0
        %511 = vmatprep.subr.bf16.mxu0 0
        %512 = vmatpush1.bf16.msra.mxu0 0
        %513 = vmatprep.subr.bf16.mxu0 0
        %514 = vmatpush1.bf16.msra.mxu0 0
        %515 = vmatprep.subr.bf16.mxu0 0
        %516 = vmatpush1.bf16.msra.mxu0 0
        %517 = vmatprep.mubr.bf16.mxu0 0
        %518 = vmatmul.mubr.bf16.gmra.mrb[0].mxu0 %v483
        %v519 = vpop.f32.mrb[0].mxu0
        %v520 = vadd.f32 %v467, %v519
        %v521 = vpop.f32.mrb[0].mxu0
        %v522 = vpop.f32.mrb[0].mxu0
        %v523 = vpop.f32.mrb[0].mxu0
        %524 = vdwg.mxu0
        %v525 = vpack.c.bf16 %v520, %v520
        %v526 = vmax.bf16 %v525, 0
        %v527 = vmin.bf16 %v526, 1086341312
        %v528 = vld [vmem:[%s5] sm:$0xf]
        %v529 = vld [vmem:[%s5 + $0x4] sm:$0xf]
        %v530 = vld [vmem:[%s5 + $0x8] sm:$0xf]
        %v531 = vld [vmem:[%s5 + $0xc] sm:$0xf]
        %v532 = vld [vmem:[%s6] sm:$0x1]
        %v534 = vlaneseq
        %v535 = vshrl.u32 %v534, 7
        %v536 = vsub.s32 0, %v535
        %v537 = vrot.slane %v532, %v536
        %v543 = vunpack.c.l.b16 %v528
        %v544 = vunpack.c.l.b16 %v529
        %v545 = vunpack.c.l.b16 %v530
        %v546 = vunpack.c.l.b16 %v531
        %v547 = vpack.c.b16 %v544, %v543
        %v548 = vpack.c.b16 %v546, %v545
        %v552 = vsel %vm481, %v527, 0
        %554 = vmatprep.subr.bf16.mxu0 0
        %555 = vmatpush1.bf16.msra.mxu0 %v547
        %556 = vmatprep.subr.bf16.mxu0 0
        %557 = vmatpush1.bf16.msra.mxu0 %v548
        %558 = vmatprep.subr.bf16.mxu0 0
        %559 = vmatpush1.bf16.msra.mxu0 0
        %560 = vmatprep.subr.bf16.mxu0 0
        %561 = vmatpush1.bf16.msra.mxu0 0
        %562 = vmatprep.subr.bf16.mxu0 0
        %563 = vmatpush1.bf16.msra.mxu0 0
        %564 = vmatprep.subr.bf16.mxu0 0
        %565 = vmatpush1.bf16.msra.mxu0 0
        %566 = vmatprep.subr.bf16.mxu0 0
        %567 = vmatpush1.bf16.msra.mxu0 0
        %568 = vmatprep.subr.bf16.mxu0 0
        %569 = vmatpush1.bf16.msra.mxu0 0
        %570 = vmatprep.subr.bf16.mxu0 0
        %571 = vmatpush1.bf16.msra.mxu0 0
        %572 = vmatprep.subr.bf16.mxu0 0
        %573 = vmatpush1.bf16.msra.mxu0 0
        %574 = vmatprep.subr.bf16.mxu0 0
        %575 = vmatpush1.bf16.msra.mxu0 0
        %576 = vmatprep.subr.bf16.mxu0 0
        %577 = vmatpush1.bf16.msra.mxu0 0
        %578 = vmatprep.subr.bf16.mxu0 0
        %579 = vmatpush1.bf16.msra.mxu0 0
        %580 = vmatprep.subr.bf16.mxu0 0
        %581 = vmatpush1.bf16.msra.mxu0 0
        %582 = vmatprep.subr.bf16.mxu0 0
        %583 = vmatpush1.bf16.msra.mxu0 0
        %584 = vmatprep.subr.bf16.mxu0 0
        %585 = vmatpush1.bf16.msra.mxu0 0
        %586 = vmatprep.mubr.bf16.mxu0 0
        %587 = vmatmul.mubr.bf16.gmra.mrb[0].mxu0 %v552
        %v588 = vpop.f32.mrb[0].mxu0
        %v589 = vadd.f32 %v537, %v588
        %v590 = vpop.f32.mrb[0].mxu0
        %v591 = vpop.f32.mrb[0].mxu0
        %v592 = vpop.f32.mrb[0].mxu0
        %593 = vdwg.mxu0
        %v594 = vpack.c.bf16 %v589, %v589
        %v595 = vmax.bf16 %v594, 0
        %v596 = vld [vmem:[#allocation8] sm:$0xf]
        %v597 = vld [vmem:[#allocation8 + $0x4] sm:$0xf]
        %v598 = vld [vmem:[#allocation8 + $0x8] sm:$0xf]
        %v599 = vld [vmem:[#allocation8 + $0xc] sm:$0xf]
        %v600 = vld [vmem:[%s8] sm:$0x1]
        %v602 = vlaneseq
        %v603 = vshrl.u32 %v602, 7
        %v604 = vsub.s32 0, %v603
        %v605 = vrot.slane %v600, %v604
        %v611 = vunpack.c.l.b16 %v596
        %v612 = vunpack.c.l.b16 %v597
        %v613 = vunpack.c.l.b16 %v598
        %v614 = vunpack.c.l.b16 %v599
        %v615 = vpack.c.b16 %v612, %v611
        %v616 = vpack.c.b16 %v614, %v613
        %v620 = vsel %vm481, %v595, 0
        %622 = vmatprep.subr.bf16.mxu0 0
        %623 = vmatpush1.bf16.msra.mxu0 %v615
        %624 = vmatprep.subr.bf16.mxu0 0
        %625 = vmatpush1.bf16.msra.mxu0 %v616
        %626 = vmatprep.subr.bf16.mxu0 0
        %627 = vmatpush1.bf16.msra.mxu0 0
        %628 = vmatprep.subr.bf16.mxu0 0
        %629 = vmatpush1.bf16.msra.mxu0 0
        %630 = vmatprep.subr.bf16.mxu0 0
        %631 = vmatpush1.bf16.msra.mxu0 0
        %632 = vmatprep.subr.bf16.mxu0 0
        %633 = vmatpush1.bf16.msra.mxu0 0
        %634 = vmatprep.subr.bf16.mxu0 0
        %635 = vmatpush1.bf16.msra.mxu0 0
        %636 = vmatprep.subr.bf16.mxu0 0
        %637 = vmatpush1.bf16.msra.mxu0 0
        %638 = vmatprep.subr.bf16.mxu0 0
        %639 = vmatpush1.bf16.msra.mxu0 0
        %640 = vmatprep.subr.bf16.mxu0 0
        %641 = vmatpush1.bf16.msra.mxu0 0
        %642 = vmatprep.subr.bf16.mxu0 0
        %643 = vmatpush1.bf16.msra.mxu0 0
        %644 = vmatprep.subr.bf16.mxu0 0
        %645 = vmatpush1.bf16.msra.mxu0 0
        %646 = vmatprep.subr.bf16.mxu0 0
        %647 = vmatpush1.bf16.msra.mxu0 0
        %648 = vmatprep.subr.bf16.mxu0 0
        %649 = vmatpush1.bf16.msra.mxu0 0
        %650 = vmatprep.subr.bf16.mxu0 0
        %651 = vmatpush1.bf16.msra.mxu0 0
        %652 = vmatprep.subr.bf16.mxu0 0
        %653 = vmatpush1.bf16.msra.mxu0 0
        %654 = vmatprep.mubr.bf16.mxu0 0
        %655 = vmatmul.mubr.bf16.gmra.mrb[0].mxu0 %v620
        %v656 = vpop.f32.mrb[0].mxu0
        %v657 = vadd.f32 %v605, %v656
        %v658 = vpop.f32.mrb[0].mxu0
        %v659 = vpop.f32.mrb[0].mxu0
        %v660 = vpop.f32.mrb[0].mxu0
        %661 = vdwg.mxu0
        %662 = vmax.xlane.f32.xlu0 %v657
        %v663 = vpop.xlane.xlu0 %662
        %v664 = vsub.f32 %v657, %v663
        %v665 = vmul.f32 %v664, 1.442695
        %v666 = vpow.pop %v665
        %667 = vadd.xlane.f32.xlu0 %v666
        %v668 = vpop.xlane.xlu0 %667
        %v669 = vrcp.pop %v668
        %v670 = vmul.f32 %v666, %v669
        %v671 = vmax.f32 %v670, 1e-10
        %v672 = vmin.f32 %v671, 1.0
        %673 = vst [vmem:[%s391] sm:$0xff] %v672
        %s674 = sand.u32 %s230, 1
        %s675 = scalar_lea.sflag [#allocation4], %s674
        %s676 = sand.u32 %s230, 1
        %s677 = smul.addr %s676, 8
        %s678 = scalar_lea.vmem [#allocation10], %s677
        // Predicated region
        $region73: #{tpu_custom_call.1} parent=55 // pred_check
          %p679 = pneg %p240
        $region74: #{tpu_custom_call.1} parent=55 // pred_check_branch
          %681 = sbr.rel (%p679) target = $region76
        $region75: #{tpu_custom_call.1} parent=55 // pred_region
          %s683 = ssub.s32 128, 128
          %684 = vsyncadd %s675, %s683
          %s685 = smul.addr %s28, 128
          %s686 = scalar_lea.hbm %s9, %s685
          %s688 = sshll.u32 %s678, 4
          %s689 = int_to_ptr.vmem [resolvable:$true] %s688
          %691 = dma.vmem_to_hbm [thread:$0]  %s689, 128, %s686, %s675
        $region76: #{tpu_custom_call.1} parent=55 // pred_fallthru
          _
      $region56: #{tpu_custom_call.1} parent=5 // pred_fallthru
        _
      %p692 = scmp.le.s32.totalorder 2, %s23
      // Predicated region
      $region77: #{tpu_custom_call.1} parent=5 // pred_check
        %p693 = pneg %p692
      $region78: #{tpu_custom_call.1} parent=5 // pred_check_branch
        %695 = sbr.rel (%p693) target = $region80
      $region79: #{tpu_custom_call.1} parent=5 // pred_region
        %s696 = ssub.s32 %s23, 2
        // Predicated region
        $region81: #{tpu_custom_call.1} parent=79 // pred_check
          %p697 = pneg %p246
        $region82: #{tpu_custom_call.1} parent=79 // pred_check_branch
          %699 = sbr.rel (%p697) target = $region84
        $region83: #{tpu_custom_call.1} parent=79 // pred_region
          %s700 = sand.u32 %s231, 1
          %s701 = scalar_lea.sflag [#allocation4], %s700
          %s702 = sand.u32 %s231, 1
          %s703 = smul.addr %s702, 8
          %s704 = scalar_lea.vmem [#allocation10], %s703
          %705 = dma.done %s701, 128
        $region84: #{tpu_custom_call.1} parent=79 // pred_fallthru
          _
      $region80: #{tpu_custom_call.1} parent=5 // pred_fallthru
        _
    $region6: #{tpu_custom_call.1} parent=1 // loop_footer
      %s27 = sadd.s32 1, %s23
    $region7: #{tpu_custom_call.1} parent=1 // loop_footer_branch
      %22 = sbr.rel target = $region3
    $region8: #{tpu_custom_call.1} parent=1 // loop_exit
      _
    %706 = vsyncpa [#allocation3], 1
    %s707 = scalar_lea.sflag [#allocation3], 1
    %708 = vsyncpa %s707, 1
    %709 = vsyncpa [#allocation6], 1
    %710 = vsyncpa [#allocation9], 1
    %711 = vsyncpa [#allocation4], 1
    %s712 = scalar_lea.sflag [#allocation4], 1
    %713 = vsyncpa %s712, 1

</llo_original>
